<compile_context>
chip_gen: v5e
topology: v5e:2x2
jax: 0.10.0
libtpu: 0.0.40
codegen_flags: <defaults>
</compile_context>

<pallas_src>
import jax
import jax.numpy as jnp
from jax.experimental import pallas as pl
from jax.experimental.pallas import tpu as pltpu

LANES = 128
SUBLANES = 8


def _cdiv(a, b):
    return -(-a // b)


def _round_down(a, b):
    return (a // b) * b


def _ssd_kernel(a_ref, b_ref, out_ref, acc_ref):
    """Accumulate sum((a-b)^2) into an (8,128) vreg; emit the per-P partial."""
    j = pl.program_id(1)

    @pl.when(j == 0)
    def _():
        acc_ref[...] = jnp.zeros_like(acc_ref)

    # Hot path: inputs stream in their native dtype and are cast here.
    # The (br,128)->(br//8,8,128) reshape is layout-preserving for the
    # (8,128)-tiled f32 VMEM layout, so the axis-0 sum is pure VALU work
    # (no cross-lane XLU reduce per grid step).
    d = a_ref[...].astype(jnp.float32) - b_ref[...].astype(jnp.float32)
    acc_ref[...] += jnp.sum((d * d).reshape(-1, SUBLANES, LANES), axis=0)

    @pl.when(j == pl.num_programs(1) - 1)
    def _():
        out_ref[0] = acc_ref[...]


def psnr(img1, img2, *, block_bytes=4 << 20):
    """PSNR(img1, img2) with images in [0,1]; matches the PyTorch module."""
    assert img1.shape == img2.shape
    n_elems = int(img1.size)

    # Stream the native dtypes (no wrapper astype); cast happens in-kernel.
    a = img1.reshape(-1)
    b = img2.reshape(-1)

    isz_a = jnp.dtype(a.dtype).itemsize
    isz_b = jnp.dtype(b.dtype).itemsize
    # Sublane packing requirement of the narrower input dtype:
    # 8 for 32-bit, 16 for bf16/fp16, 32 for int8/fp8.
    pack = max(SUBLANES, 32 // max(1, min(isz_a, isz_b)))

    rows_total = n_elems // LANES  # complete 128-lane rows

    ssd_bulk = jnp.float32(0.0)
    bulk_elems = 0

    if rows_total >= pack:
        # Rows per block sized by bytes of the *wider* input tile (~block_bytes
        # per input tile), rounded to the packing requirement.
        br_target = max(
            pack,
            _round_down(block_bytes // (LANES * max(isz_a, isz_b)), pack),
        )
        nb_total = max(1, _cdiv(rows_total, br_target))
        num_par = 2 if nb_total >= 2 else 1  # megacore split (v7x: 2 TCs)
        nb_total = _cdiv(nb_total, num_par) * num_par
        br = max(pack, _round_down(rows_total // nb_total, pack))
        nb_per_par = nb_total // num_par
        bulk_rows = nb_total * br
        bulk_elems = bulk_rows * LANES

        # Lane-aligned prefix, viewed as (rows, 128). When n_elems is a
        # multiple of 128 (the common case) this is a pure reshape (no copy);
        # the grid only touches the first bulk_rows rows.
        lane_elems = rows_total * LANES
        a2 = (a if lane_elems == n_elems else a[:lane_elems]).reshape(rows_total, LANES)
        b2 = (b if lane_elems == n_elems else b[:lane_elems]).reshape(rows_total, LANES)

        in_map = lambda p, j: (p * nb_per_par + j, 0)

        partials = pl.pallas_call(
            _ssd_kernel,
            out_shape=jax.ShapeDtypeStruct((num_par, SUBLANES, LANES), jnp.float32),
            grid_spec=pltpu.PrefetchScalarGridSpec(
                num_scalar_prefetch=0,
                grid=(num_par, nb_per_par),
                in_specs=[
                    pl.BlockSpec((br, LANES), in_map),
                    pl.BlockSpec((br, LANES), in_map),
                ],
                out_specs=pl.BlockSpec((1, SUBLANES, LANES), lambda p, j: (p, 0, 0)),
                scratch_shapes=[pltpu.VMEM((SUBLANES, LANES), jnp.float32)],
            ),
            compiler_params=pltpu.CompilerParams(
                dimension_semantics=("parallel", "arbitrary"),
                # 2 inputs x 2 pipeline buffers x 4 MiB = 16 MiB live; raise the
                # scoped limit so the single code path is safe on v5e (16 MiB
                # default) while staying well inside v7x's 64 MiB physical VMEM.
                vmem_limit_bytes=32 << 20,
            ),
            cost_estimate=pl.CostEstimate(
                flops=3 * bulk_elems,
                transcendentals=0,
                bytes_accessed=bulk_elems * (isz_a + isz_b)
                + num_par * SUBLANES * LANES * 4,
            ),
        )(a2, b2)

        # Single tiny cross-lane reduce of the (num_par, 8, 128) partials.
        ssd_bulk = jnp.sum(partials)

    # Small ragged tail (< one block + lane remainder): plain fused jnp reduce,
    # no padded HBM copy of the whole inputs.
    if bulk_elems < n_elems:
        at = a[bulk_elems:].astype(jnp.float32)
        bt = b[bulk_elems:].astype(jnp.float32)
        dt = at - bt
        ssd_tail = jnp.sum(dt * dt)
    else:
        ssd_tail = jnp.float32(0.0)

    # Finalize: fold the *255 scaling in here (algebraically identical to
    # scaling before subtraction) and compute the scalar PSNR.
    ssd = (ssd_bulk + ssd_tail) * jnp.float32(255.0 * 255.0)
    mse = ssd / jnp.float32(n_elems)
    return 20.0 * jnp.log10(255.0 / jnp.sqrt(mse))


def psnr_ref(img1, img2):
    a = img1.astype(jnp.float32) * 255.0
    b = img2.astype(jnp.float32) * 255.0
    mse = jnp.mean((a - b) ** 2)
    return 20.0 * jnp.log10(255.0 / jnp.sqrt(mse))


if __name__ == "__main__":
    key = jax.random.PRNGKey(0)
    k1, k2 = jax.random.split(key)
    # NCHW inputs, values in [0, 1] like normalized images.
    x = jax.random.uniform(k1, (2, 4, 16, 16), dtype=jnp.float32)
    y = jnp.clip(x + 0.05 * jax.random.normal(k2, (2, 4, 16, 16)), 0.0, 1.0)

    out = jax.block_until_ready(psnr(x, y))
    ref = jax.block_until_ready(psnr_ref(x, y))

    assert jnp.allclose(out, ref, rtol=1e-5, atol=1e-4), (out, ref)
    print("KERNEL_OK")
</pallas_src>

<mosaic_0001>
module attributes {stable_mosaic.version = 11 : i64} {
  func.func @_ssd_kernel(%arg0: i32, %arg1: i32, %arg2: memref<16x128xf32, #tpu.memory_space<vmem>>, %arg3: memref<16x128xf32, #tpu.memory_space<vmem>>, %arg4: memref<1x8x128xf32, #tpu.memory_space<vmem>>, %arg5: memref<8x128xf32, #tpu.memory_space<vmem>>) attributes {dimension_semantics = [#tpu.dimension_semantics<parallel>, #tpu.dimension_semantics<arbitrary>], iteration_bounds = array<i64: 1, 1>, scalar_prefetch = 0 : i64, scratch_operands = 1 : i64, tpu.core_type = #tpu.core_type<tc>, window_params = [{transform_indices = @transform_0, window_bounds = array<i64: 16, 128>}, {transform_indices = @transform_1, window_bounds = array<i64: 16, 128>}, {transform_indices = @transform_2, window_bounds = array<i64: 1, 8, 128>}]} {
    %c0_i32 = arith.constant 0 : i32
    %0 = arith.cmpi eq, %arg1, %c0_i32 : i32
    %1 = arith.extui %0 : i1 to i32
    %c0_i32_0 = arith.constant 0 : i32
    %2 = arith.cmpi ne, %1, %c0_i32_0 : i32
    scf.if %2 {
      %cst_10 = arith.constant 0.000000e+00 : f32
      %15 = vector.broadcast %cst_10 : f32 to vector<8x128xf32>
      %c0_11 = arith.constant 0 : index
      %c0_12 = arith.constant 0 : index
      %16 = vector.load %arg5[%c0_11, %c0_12] : memref<8x128xf32, #tpu.memory_space<vmem>>, vector<8x128xf32>
      tpu.vector_store %arg5[%c0_11, %c0_12], %15 {strides = array<i32>} : memref<8x128xf32, #tpu.memory_space<vmem>>, vector<8x128xf32>,
    } else {
    }
    %c0 = arith.constant 0 : index
    %c0_1 = arith.constant 0 : index
    %3 = vector.load %arg2[%c0, %c0_1] : memref<16x128xf32, #tpu.memory_space<vmem>>, vector<16x128xf32>
    %c0_2 = arith.constant 0 : index
    %c0_3 = arith.constant 0 : index
    %4 = vector.load %arg3[%c0_2, %c0_3] : memref<16x128xf32, #tpu.memory_space<vmem>>, vector<16x128xf32>
    %5 = arith.subf %3, %4 : vector<16x128xf32>
    %c0_4 = arith.constant 0 : index
    %c0_5 = arith.constant 0 : index
    %6 = vector.load %arg5[%c0_4, %c0_5] : memref<8x128xf32, #tpu.memory_space<vmem>>, vector<8x128xf32>
    %7 = arith.mulf %5, %5 : vector<16x128xf32>
    %8 = vector.shape_cast %7 : vector<16x128xf32> to vector<2x8x128xf32>
    %cst = arith.constant dense<0.000000e+00> : vector<8x128xf32>
    %9 = vector.multi_reduction <add>, %8, %cst [0] : vector<2x8x128xf32> to vector<8x128xf32>
    %10 = arith.addf %6, %9 : vector<8x128xf32>
    %c0_6 = arith.constant 0 : index
    %c0_7 = arith.constant 0 : index
    %11 = vector.load %arg5[%c0_6, %c0_7] : memref<8x128xf32, #tpu.memory_space<vmem>>, vector<8x128xf32>
    tpu.vector_store %arg5[%c0_6, %c0_7], %10 {strides = array<i32>} : memref<8x128xf32, #tpu.memory_space<vmem>>, vector<8x128xf32>,
    %c0_i32_8 = arith.constant 0 : i32
    %12 = arith.cmpi eq, %arg1, %c0_i32_8 : i32
    %13 = arith.extui %12 : i1 to i32
    %c0_i32_9 = arith.constant 0 : i32
    %14 = arith.cmpi ne, %13, %c0_i32_9 : i32
    scf.if %14 {
      %c0_10 = arith.constant 0 : index
      %c0_11 = arith.constant 0 : index
      %15 = vector.load %arg5[%c0_10, %c0_11] : memref<8x128xf32, #tpu.memory_space<vmem>>, vector<8x128xf32>
      %c0_12 = arith.constant 0 : index
      %c0_13 = arith.constant 0 : index
      %c0_14 = arith.constant 0 : index
      %16 = vector.load %arg4[%c0_12, %c0_13, %c0_14] : memref<1x8x128xf32, #tpu.memory_space<vmem>>, vector<1x8x128xf32>
      %17 = vector.shape_cast %16 : vector<1x8x128xf32> to vector<8x128xf32>
      %18 = vector.shape_cast %15 : vector<8x128xf32> to vector<1x8x128xf32>
      tpu.vector_store %arg4[%c0_12, %c0_13, %c0_14], %18 {strides = array<i32>} : memref<1x8x128xf32, #tpu.memory_space<vmem>>, vector<1x8x128xf32>,
    } else {
    }
    return
  }
  func.func @transform_0(%arg0: i32, %arg1: i32) -> (i32, i32) {
    %c1_i32 = arith.constant 1 : i32
    %0 = arith.muli %arg0, %c1_i32 : i32
    %1 = arith.addi %0, %arg1 : i32
    %c0_i32 = arith.constant 0 : i32
    %c0_i32_0 = arith.constant 0 : i32
    return %1, %c0_i32 : i32, i32
  }
  func.func @transform_1(%arg0: i32, %arg1: i32) -> (i32, i32) {
    %c1_i32 = arith.constant 1 : i32
    %0 = arith.muli %arg0, %c1_i32 : i32
    %1 = arith.addi %0, %arg1 : i32
    %c0_i32 = arith.constant 0 : i32
    %c0_i32_0 = arith.constant 0 : i32
    return %1, %c0_i32 : i32, i32
  }
  func.func @transform_2(%arg0: i32, %arg1: i32) -> (i32, i32, i32) {
    %c0_i32 = arith.constant 0 : i32
    %c0_i32_0 = arith.constant 0 : i32
    %c0_i32_1 = arith.constant 0 : i32
    return %arg0, %c0_i32, %c0_i32_0 : i32, i32, i32
  }
}

</mosaic_0001>

<llo_original>
// kernel: tpu_custom_call.1
$region0: #{tpu_custom_call.1}
  #allocation0 [shape = 'u32[]', space=smem, size = 0x4, offset = 0x4, fixed_abs, tag = 'smem constant byte address 0x4 - core index']
  #allocation1 [shape = 'u32[72,128]{1,0:T(1,128)}', space=vmem, size = 0x9000, scoped, tag = 'internal scratch']
  #allocation2 [shape = 'f32[8,128]{1,0:T(8,128)}', space=vmem, size = 0x1000, scoped, tag = 'scratch operand']
  %s0 = inlined_call_operand.hbm [shape: f32[16,128], index: 0, kind: input, shape index: {}]
  %s1 = inlined_call_operand.hbm [shape: f32[16,128], index: 1, kind: input, shape index: {}]
  %s2 = inlined_call_operand.hbm [shape: f32[1,8,128], index: 2, kind: output, shape index: {}]
  %s3 = sld [smem:[#allocation0]]
  $region34: #{tpu_custom_call.1} parent=0
    _
  %s5 = ssub.s32 1, %s3
  %s6 = scalar_select 0, %s5, %s3
  $region1: #{tpu_custom_call.1} parent=0
    #allocation3 [shape = 'u8[8192]{0}', space=vmem, size = 0x2000, scoped, tag = 'input window, operand 0, single buffered']
    #allocation4 [shape = 's32[1]{0}', space=sflag, size = 0x4, scoped, tag = 'scoped memory for tpu_custom_call.1']
    #allocation5 [shape = 's32[1]{0}', space=sflag, size = 0x4, scoped, tag = 'scoped memory for tpu_custom_call.1']
    #allocation6 [shape = 'u8[8192]{0}', space=vmem, size = 0x2000, scoped, tag = 'input window, operand 1, single buffered']
    #allocation7 [shape = 's32[1]{0}', space=sflag, size = 0x4, scoped, tag = 'scoped memory for tpu_custom_call.1']
    #allocation8 [shape = 'u8[4096]{0}', space=vmem, size = 0x1000, scoped, tag = 'output window, operand 0, single buffered']
    %7 = vsyncpa [#allocation4], 0
    %8 = vsyncpa [#allocation7], 0
    %9 = vsyncpa [#allocation5], 0
    // Predicated region
    $region2: #{tpu_custom_call.1} parent=1 // pred_check
      _
    $region3: #{tpu_custom_call.1} parent=1 // pred_check_branch
      %11 = sbr.rel (0) target = $region5
    $region4: #{tpu_custom_call.1} parent=1 // pred_region
      %s12 = sadd.s32 0, 0
      %s13 = smul.u32 2, %s12
      %15 = vsyncadd [#allocation4], 0
      %s16 = smul.addr %s13, 8
      %s17 = scalar_lea.hbm %s0, %s16
      %s18 = sshll.u32 %s17, 4
      %s19 = int_to_ptr.hbm [resolvable:$true] %s18
      %s20 = sshll.u32 [#allocation3], 4
      %s21 = int_to_ptr.vmem [resolvable:$true] %s20
      %26 = dma.hbm_to_vmem [thread:$0]  %s19, 256, %s21, [#allocation4], 128, 128, 8
    $region5: #{tpu_custom_call.1} parent=1 // pred_fallthru
      _
    // Predicated region
    $region6: #{tpu_custom_call.1} parent=1 // pred_check
      _
    $region7: #{tpu_custom_call.1} parent=1 // pred_check_branch
      %28 = sbr.rel (0) target = $region9
    $region8: #{tpu_custom_call.1} parent=1 // pred_region
      %s29 = sadd.s32 0, 0
      %s30 = smul.u32 2, %s29
      %32 = vsyncadd [#allocation7], 0
      %s33 = smul.addr %s30, 8
      %s34 = scalar_lea.hbm %s1, %s33
      %s35 = sshll.u32 %s34, 4
      %s36 = int_to_ptr.hbm [resolvable:$true] %s35
      %s37 = sshll.u32 [#allocation6], 4
      %s38 = int_to_ptr.vmem [resolvable:$true] %s37
      %43 = dma.hbm_to_vmem [thread:$0]  %s36, 256, %s38, [#allocation7], 128, 128, 8
    $region9: #{tpu_custom_call.1} parent=1 // pred_fallthru
      _
    // Predicated region
    $region10: #{tpu_custom_call.1} parent=1 // pred_check
      _
    $region11: #{tpu_custom_call.1} parent=1 // pred_check_branch
      %45 = sbr.rel (0) target = $region13
    $region12: #{tpu_custom_call.1} parent=1 // pred_region
      %47 = dma.done [#allocation4], 256
    $region13: #{tpu_custom_call.1} parent=1 // pred_fallthru
      _
    // Predicated region
    $region14: #{tpu_custom_call.1} parent=1 // pred_check
      _
    $region15: #{tpu_custom_call.1} parent=1 // pred_check_branch
      %49 = sbr.rel (0) target = $region17
    $region16: #{tpu_custom_call.1} parent=1 // pred_region
      %51 = dma.done [#allocation7], 256
    $region17: #{tpu_custom_call.1} parent=1 // pred_fallthru
      _
    %s52 = sadd.s32 0, 0
    %s53 = smul.u32 2, %s52
    %s54 = sadd.s32 0, 0
    %s55 = smul.u32 2, %s54
    %p56 = scmp.eq.s32.totalorder 0, 0
    // Predicated region
    $region18: #{tpu_custom_call.1} parent=1 // pred_check
      %p57 = pneg %p56
    $region19: #{tpu_custom_call.1} parent=1 // pred_check_branch
      %59 = sbr.rel (%p57) target = $region21
    $region20: #{tpu_custom_call.1} parent=1 // pred_region
      %60 = vst [vmem:[#allocation2] sm:$0xff] 0.0
    $region21: #{tpu_custom_call.1} parent=1 // pred_fallthru
      _
    %v61 = vld [vmem:[#allocation3] sm:$0xff]
    %v62 = vld [vmem:[#allocation3 + $0x8] sm:$0xff]
    %v63 = vld [vmem:[#allocation6] sm:$0xff]
    %v64 = vld [vmem:[#allocation6 + $0x8] sm:$0xff]
    %v65 = vsub.f32 %v61, %v63
    %v66 = vsub.f32 %v62, %v64
    %v67 = vld [vmem:[#allocation2] sm:$0xff]
    %v68 = vmul.f32 %v65, %v65
    %v69 = vmul.f32 %v66, %v66
    %v70 = vadd.f32 %v68, %v69
    %v71 = vadd.f32 %v67, %v70
    %72 = vst [vmem:[#allocation2] sm:$0xff] %v71
    // Predicated region
    $region22: #{tpu_custom_call.1} parent=1 // pred_check
      %p73 = pneg %p56
    $region23: #{tpu_custom_call.1} parent=1 // pred_check_branch
      %75 = sbr.rel (%p73) target = $region25
    $region24: #{tpu_custom_call.1} parent=1 // pred_region
      %v76 = vld [vmem:[#allocation2] sm:$0xff]
      %77 = vst [vmem:[#allocation8] sm:$0xff] %v76
    $region25: #{tpu_custom_call.1} parent=1 // pred_fallthru
      _
    // Predicated region
    $region26: #{tpu_custom_call.1} parent=1 // pred_check
      _
    $region27: #{tpu_custom_call.1} parent=1 // pred_check_branch
      %79 = sbr.rel (0) target = $region29
    $region28: #{tpu_custom_call.1} parent=1 // pred_region
      %81 = vsyncadd [#allocation5], 0
      %s83 = sshll.u32 [#allocation8], 4
      %s84 = int_to_ptr.vmem [resolvable:$true] %s83
      %s85 = sshll.u32 %s2, 4
      %s86 = int_to_ptr.hbm [resolvable:$true] %s85
      %88 = dma.vmem_to_hbm [thread:$0]  %s84, 128, %s86, [#allocation5]
    $region29: #{tpu_custom_call.1} parent=1 // pred_fallthru
      _
    // Predicated region
    $region30: #{tpu_custom_call.1} parent=1 // pred_check
      _
    $region31: #{tpu_custom_call.1} parent=1 // pred_check_branch
      %90 = sbr.rel (0) target = $region33
    $region32: #{tpu_custom_call.1} parent=1 // pred_region
      %92 = dma.done [#allocation5], 128
    $region33: #{tpu_custom_call.1} parent=1 // pred_fallthru
      _
    %93 = vsyncpa [#allocation4], 1
    %94 = vsyncpa [#allocation7], 1
    %95 = vsyncpa [#allocation5], 1

</llo_original>
